<compile_context>
chip_gen: v5e
topology: v5e:2x2
jax: 0.10.0
libtpu: 0.0.40
codegen_flags: <defaults>
</compile_context>

<pallas_src>
import functools

import jax
import jax.numpy as jnp
from jax.experimental import pallas as pl
from jax.experimental.pallas import tpu as pltpu

_LANE = 128
_SUBLANE = 8


def _round_up(x, m):
    return ((x + m - 1) // m) * m


def _vmem_capacity_bytes():
    """Per-core VMEM capacity; conservative fallback if the query fails."""
    try:
        cap = getattr(pltpu.get_tpu_info(), "vmem_capacity_bytes", None)
        if cap:
            return int(cap)
    except Exception:
        pass
    return 64 * 2 ** 20  # v7x per-TensorCore VMEM (smallest of v5e/v6e/v7x)


def _qa_outputs_kernel(x_ref, w_ref, b_ref, o_ref, *, chunk):
    # x_ref: (tm, H), w_ref: (H, 2), b_ref: (1, 2) f32, o_ref: (2, tm).
    bias = b_ref[...]                                   # (1, 2) f32
    w = w_ref[...]                                      # (H, 2)
    tm = x_ref.shape[0]
    # Process the row tile in <=256-row sub-chunks: the (chunk, 2) f32 MXU
    # result has only 2/128 live lanes, so chunking bounds vreg pressure
    # before the small XLU transpose to the lane-dense (2, chunk) layout.
    for c in range(0, tm, chunk):
        acc = jnp.dot(x_ref[c:c + chunk, :], w,
                      preferred_element_type=jnp.float32)      # (chunk, 2) f32
        acc = acc + bias                                        # bias in f32
        o_ref[:, c:c + chunk] = acc.T.astype(o_ref.dtype)       # lane-dense st


def qa_outputs_forward(x, weight_t, bias, *, tm=2048):
    """x: [B, S, H] (any float dtype), weight_t: [H, 2], bias: [2].

    Returns (start_logits, end_logits), each [B, S] in x.dtype.
    """
    B, S, H = x.shape
    M = B * S
    out_dtype = x.dtype

    # x is consumed in its native dtype (no wrapper cast: that would add a
    # full extra HBM pass).  Only the tiny weight is cast to match x.
    x2d = x.reshape(M, H)
    w2d = weight_t.astype(x.dtype)
    b2d = bias.reshape(1, 2).astype(jnp.float32)

    x_item = jnp.dtype(x2d.dtype).itemsize
    w_item = jnp.dtype(w2d.dtype).itemsize
    out_item = jnp.dtype(out_dtype).itemsize

    # Only if the whole problem is smaller than one 128-row tile do we pad the
    # activation (a few KiB at most).  The general path never pads x.
    M_work = M
    if M < _LANE:
        x2d = jnp.pad(x2d, ((0, _LANE - M), (0, 0)))
        M_work = _LANE

    # --- Generation-aware tile sizing --------------------------------------
    vmem_cap = _vmem_capacity_bytes()
    vmem_budget = (7 * vmem_cap) // 10            # ~70% of per-core VMEM
    # Fixed VMEM: weight ((H,2), lane-padded to 128) + bias, double-buffered,
    # plus headroom for Mosaic-internal scratch.
    fixed_bytes = (2 * _round_up(H, _SUBLANE) * _LANE * w_item
                   + 2 * _SUBLANE * _LANE * 4
                   + (2 << 20))
    # Per-row VMEM: double-buffered x row + double-buffered output column
    # (the (2, tm) output block is sublane-padded to 8).
    per_row_bytes = 2 * H * x_item + 2 * _SUBLANE * out_item

    tm_vmem_cap = max(_LANE,
                      ((vmem_budget - fixed_bytes) // per_row_bytes)
                      // _LANE * _LANE)
    # Keep >= 2 grid steps when there are >= 2 row tiles of work, so the
    # single "parallel" axis can feed both TensorCores on v7x.
    tm_tc_cap = _round_up(pl.cdiv(M_work, 2), _LANE)
    tm_data_cap = (M_work // _LANE) * _LANE       # block never exceeds array
    tm_eff = max(_LANE, min(_round_up(tm, _LANE), tm_vmem_cap, tm_tc_cap,
                            tm_data_cap))

    grid = pl.cdiv(M_work, tm_eff)                # partial tail block for x ok
    M_out = grid * tm_eff                         # pad only the tiny output
    chunk = 256 if tm_eff % 256 == 0 else _LANE

    needed_bytes = fixed_bytes + per_row_bytes * tm_eff
    vmem_limit = int(min((85 * vmem_cap) // 100,
                         max(needed_bytes + needed_bytes // 2, 16 * 2 ** 20)))

    cost = pl.CostEstimate(
        flops=2 * M * H * 2,
        transcendentals=0,
        bytes_accessed=M * H * x_item + H * 2 * w_item + 2 * M_out * out_item,
    )

    logits_t = pl.pallas_call(
        functools.partial(_qa_outputs_kernel, chunk=chunk),
        out_shape=jax.ShapeDtypeStruct((2, M_out), out_dtype),
        grid_spec=pltpu.PrefetchScalarGridSpec(
            num_scalar_prefetch=0,
            grid=(grid,),
            in_specs=[
                pl.BlockSpec((tm_eff, H), lambda i: (i, 0)),    # x row tile
                pl.BlockSpec((H, 2), lambda i: (0, 0)),         # full weight
                pl.BlockSpec((1, 2), lambda i: (0, 0)),         # full bias
            ],
            out_specs=pl.BlockSpec((2, tm_eff), lambda i: (0, i)),  # lane-dense
        ),
        compiler_params=pltpu.CompilerParams(
            dimension_semantics=("parallel",),
            vmem_limit_bytes=vmem_limit,
        ),
        cost_estimate=cost,
    )(x2d, w2d, b2d)

    # Contiguous row views — no stride-2 slicing.
    start_logits = logits_t[0, :M].reshape(B, S)
    end_logits = logits_t[1, :M].reshape(B, S)
    return start_logits, end_logits


if __name__ == "__main__":
    # Small shapes consistent with the module: batch=2, seq=8, hidden=32.
    B, S, H = 2, 8, 32
    key = jax.random.PRNGKey(0)
    kx, kw, kb = jax.random.split(key, 3)

    x = jax.random.normal(kx, (B, S, H), dtype=jnp.float32)
    # PyTorch nn.Linear(H, 2) weight is [2, H]; we carry its transpose [H, 2].
    weight_t = jax.random.normal(kw, (H, 2), dtype=jnp.float32) * 0.02
    bias = jax.random.normal(kb, (2,), dtype=jnp.float32) * 0.02

    fwd = jax.jit(qa_outputs_forward)
    start_logits, end_logits = fwd(x, weight_t, bias)
    jax.block_until_ready((start_logits, end_logits))

    # Reference check in plain JAX (f32 inputs -> tight tolerance).
    ref = jnp.einsum("bsh,ho->bso", x, weight_t) + bias
    assert start_logits.shape == (B, S) and end_logits.shape == (B, S)
    assert jnp.allclose(start_logits, ref[..., 0], atol=1e-5)
    assert jnp.allclose(end_logits, ref[..., 1], atol=1e-5)

    print("KERNEL_OK")
</pallas_src>

<mosaic_0001>
module attributes {stable_mosaic.version = 11 : i64} {
  func.func @_qa_outputs_kernel(%arg0: i32, %arg1: memref<128x32xf32, #tpu.memory_space<vmem>>, %arg2: memref<32x2xf32, #tpu.memory_space<vmem>>, %arg3: memref<1x2xf32, #tpu.memory_space<vmem>>, %arg4: memref<2x128xf32, #tpu.memory_space<vmem>>) attributes {dimension_semantics = [#tpu.dimension_semantics<parallel>], iteration_bounds = array<i64: 1>, scalar_prefetch = 0 : i64, scratch_operands = 0 : i64, tpu.core_type = #tpu.core_type<tc>, window_params = [{transform_indices = @transform_0, window_bounds = array<i64: 128, 32>}, {pipeline_mode = #tpu.pipeline_mode<synchronous>, transform_indices = @transform_1, window_bounds = array<i64: 32, 2>}, {pipeline_mode = #tpu.pipeline_mode<synchronous>, transform_indices = @transform_2, window_bounds = array<i64: 1, 2>}, {transform_indices = @transform_3, window_bounds = array<i64: 2, 128>}]} {
    %c0 = arith.constant 0 : index
    %c0_0 = arith.constant 0 : index
    %0 = vector.load %arg3[%c0, %c0_0] : memref<1x2xf32, #tpu.memory_space<vmem>>, vector<1x2xf32>
    %c0_1 = arith.constant 0 : index
    %c0_2 = arith.constant 0 : index
    %1 = vector.load %arg2[%c0_1, %c0_2] : memref<32x2xf32, #tpu.memory_space<vmem>>, vector<32x2xf32>
    %c0_3 = arith.constant 0 : index
    %c0_4 = arith.constant 0 : index
    %2 = vector.load %arg1[%c0_3, %c0_4] : memref<128x32xf32, #tpu.memory_space<vmem>>, vector<128x32xf32>
    %cst = arith.constant dense<0.000000e+00> : vector<128x2xf32>
    %3 = tpu.matmul %2, %1, %cst {dimension_numbers = #tpu.dot_dimension_numbers<[1], [0], [0], [1], [0, 0, 1, 1], [], []>} : vector<128x32xf32>, vector<32x2xf32>, vector<128x2xf32> -> vector<128x2xf32>
    %4 = vector.broadcast %0 : vector<1x2xf32> to vector<128x2xf32>
    %5 = arith.addf %3, %4 : vector<128x2xf32>
    %6 = tpu.transpose %5, [1, 0] : vector<128x2xf32> -> vector<2x128xf32>
    %c0_5 = arith.constant 0 : index
    %c0_6 = arith.constant 0 : index
    %7 = vector.load %arg4[%c0_5, %c0_6] : memref<2x128xf32, #tpu.memory_space<vmem>>, vector<2x128xf32>
    tpu.vector_store %arg4[%c0_5, %c0_6], %6 {strides = array<i32>} : memref<2x128xf32, #tpu.memory_space<vmem>>, vector<2x128xf32>,
    return
  }
  func.func @transform_0(%arg0: i32) -> (i32, i32) {
    %c0_i32 = arith.constant 0 : i32
    %c0_i32_0 = arith.constant 0 : i32
    return %arg0, %c0_i32 : i32, i32
  }
  func.func @transform_1(%arg0: i32) -> (i32, i32) {
    %c0_i32 = arith.constant 0 : i32
    %c0_i32_0 = arith.constant 0 : i32
    %c0_i32_1 = arith.constant 0 : i32
    return %c0_i32, %c0_i32_0 : i32, i32
  }
  func.func @transform_2(%arg0: i32) -> (i32, i32) {
    %c0_i32 = arith.constant 0 : i32
    %c0_i32_0 = arith.constant 0 : i32
    %c0_i32_1 = arith.constant 0 : i32
    return %c0_i32, %c0_i32_0 : i32, i32
  }
  func.func @transform_3(%arg0: i32) -> (i32, i32) {
    %c0_i32 = arith.constant 0 : i32
    %c0_i32_0 = arith.constant 0 : i32
    return %c0_i32, %arg0 : i32, i32
  }
}

</mosaic_0001>

<llo_original>
// kernel: squeeze.3
$region0: #{squeeze.3}
  %s0 = inlined_call_operand.vmem [shape: f32[16], index: 0, kind: input, shape index: {}]
  %s1 = inlined_call_operand.hbm [shape: f32[2,8], index: 1, kind: output, shape index: {}]
  $region1: #{squeeze.3} parent=0
    #allocation0 [shape = 'u8[1024]{0}', space=vmem, size = 0x400, scoped, tag = 'operand span for operand 1']
    #allocation1 [shape = 's32[1]{0}', space=sflag, size = 0x4, scoped, tag = 'scoped memory for squeeze.3']
    #allocation2 [shape = 'u8[4096]{0}', space=vmem, size = 0x1000, scoped, tag = 'scoped mem for output reshape']
    #allocation3 [shape = 'u8[4096]{0}', space=vmem, size = 0x1000, scoped, tag = 'scoped mem for input reshape']
    %2 = vsyncpa [#allocation1], 0
    %s4 = ssub.s32 2, 1
    %v5 = vld [vmem:[%s0] sm:%s4]
    %6 = vst [vmem:[#allocation3] sm:%s4] %v5
    %v7 = vld [vmem:[#allocation3] sm:$0x1]
    %vm8 = vcmask 64512
    %9 = vst.msk [vmem:[#allocation2] sm:$0x1] %vm8, %v7
    %v10 = vld [vmem:[#allocation3] sm:$0x1]
    %11 = vrot.lane.b32.xlu0 %v10, 120
    %v12 = vpop.permute.xlu0 %11
    %vm13 = vcmask 64512
    %s14 = scalar_lea.vmem [#allocation2], 1
    %15 = vst.msk [vmem:[%s14] sm:$0x1] %vm13, %v12
    %s17 = ssub.s32 4, 1
    %v18 = vld [vmem:[#allocation2] sm:%s17]
    %s20 = ssub.s32 4, 1
    %21 = vst [vmem:[#allocation0] sm:%s20] %v18
    %23 = vsyncadd [#allocation1], 0
    %s25 = sshll.u32 [#allocation0], 4
    %s26 = int_to_ptr.vmem [resolvable:$true] %s25
    %s27 = sshll.u32 %s1, 4
    %s28 = int_to_ptr.hbm [resolvable:$true] %s27
    %30 = dma.vmem_to_hbm [thread:$0]  %s26, 32, %s28, [#allocation1]
    %32 = dma.done [#allocation1], 32
    %33 = vsyncpa [#allocation1], 1

// kernel: qa_outputs_forward.1
$region0: #{qa_outputs_forward.1}
  #allocation0 [shape = 'u32[]', space=smem, size = 0x4, offset = 0x4, fixed_abs, tag = 'smem constant byte address 0x4 - core index']
  #allocation1 [shape = 'u32[72,128]{1,0:T(1,128)}', space=vmem, size = 0x9000, scoped, tag = 'internal scratch']
  %s0 = inlined_call_operand.vmem [shape: f32[128,32], index: 0, kind: input, shape index: {}]
  %s1 = inlined_call_operand.vmem [shape: f32[32,2], index: 1, kind: input, shape index: {}]
  %s2 = inlined_call_operand.vmem [shape: f32[1,2], index: 2, kind: input, shape index: {}]
  %s3 = inlined_call_operand.vmem [shape: f32[2,128], index: 3, kind: output, shape index: {}]
  %s4 = sld [smem:[#allocation0]]
  $region22: #{qa_outputs_forward.1} parent=0
    _
  %s6 = ssub.s32 1, %s4
  %s7 = scalar_select 0, %s6, %s4
  // Predicated region
  $region2: #{qa_outputs_forward.1} parent=0 // pred_check
    _
  $region3: #{qa_outputs_forward.1} parent=0 // pred_check_branch
    %9 = sbr.rel (0) target = $region5
  $region4: #{qa_outputs_forward.1} parent=0 // pred_region
    _
  $region5: #{qa_outputs_forward.1} parent=0 // pred_fallthru
    _
  // Predicated region
  $region6: #{qa_outputs_forward.1} parent=0 // pred_check
    _
  $region7: #{qa_outputs_forward.1} parent=0 // pred_check_branch
    %11 = sbr.rel (0) target = $region9
  $region8: #{qa_outputs_forward.1} parent=0 // pred_region
    _
  $region9: #{qa_outputs_forward.1} parent=0 // pred_fallthru
    _
  // Predicated region
  $region10: #{qa_outputs_forward.1} parent=0 // pred_check
    _
  $region11: #{qa_outputs_forward.1} parent=0 // pred_check_branch
    %13 = sbr.rel (0) target = $region13
  $region12: #{qa_outputs_forward.1} parent=0 // pred_region
    _
  $region13: #{qa_outputs_forward.1} parent=0 // pred_fallthru
    _
  %v14 = vld [vmem:[%s2] sm:$0x1]
  %v15 = vld [vmem:[%s1] sm:$0xff]
  %v16 = vld [vmem:[%s1 + $0x8] sm:$0xff]
  %v17 = vld [vmem:[%s1 + $0x10] sm:$0xff]
  %v18 = vld [vmem:[%s1 + $0x18] sm:$0xff]
  %v19 = vld [vmem:[%s0] sm:$0xff]
  %v20 = vld [vmem:[%s0 + $0x8] sm:$0xff]
  %v21 = vld [vmem:[%s0 + $0x10] sm:$0xff]
  %v22 = vld [vmem:[%s0 + $0x18] sm:$0xff]
  %v23 = vld [vmem:[%s0 + $0x20] sm:$0xff]
  %v24 = vld [vmem:[%s0 + $0x28] sm:$0xff]
  %v25 = vld [vmem:[%s0 + $0x30] sm:$0xff]
  %v26 = vld [vmem:[%s0 + $0x38] sm:$0xff]
  %v27 = vld [vmem:[%s0 + $0x40] sm:$0xff]
  %v28 = vld [vmem:[%s0 + $0x48] sm:$0xff]
  %v29 = vld [vmem:[%s0 + $0x50] sm:$0xff]
  %v30 = vld [vmem:[%s0 + $0x58] sm:$0xff]
  %v31 = vld [vmem:[%s0 + $0x60] sm:$0xff]
  %v32 = vld [vmem:[%s0 + $0x68] sm:$0xff]
  %v33 = vld [vmem:[%s0 + $0x70] sm:$0xff]
  %v34 = vld [vmem:[%s0 + $0x78] sm:$0xff]
  %v36 = vperm.slane %v14, 0
  %vm38 = vcmask 261120
  %v40 = vsel %vm38, %v19, 0
  %v43 = vsel %vm38, %v20, 0
  %v46 = vsel %vm38, %v21, 0
  %v49 = vsel %vm38, %v22, 0
  %v52 = vsel %vm38, %v23, 0
  %v55 = vsel %vm38, %v24, 0
  %v58 = vsel %vm38, %v25, 0
  %v61 = vsel %vm38, %v26, 0
  %v64 = vsel %vm38, %v27, 0
  %v67 = vsel %vm38, %v28, 0
  %v70 = vsel %vm38, %v29, 0
  %v73 = vsel %vm38, %v30, 0
  %v76 = vsel %vm38, %v31, 0
  %v79 = vsel %vm38, %v32, 0
  %v82 = vsel %vm38, %v33, 0
  %v85 = vsel %vm38, %v34, 0
  %87 = vmatpush.msra.mxu0 0.0
  %88 = vmatpush.msra.mxu0 0.0
  %89 = vmatpush.msra.mxu0 0.0
  %90 = vmatpush.msra.mxu0 0.0
  %91 = vmatpush.msra.mxu0 0.0
  %92 = vmatpush.msra.mxu0 0.0
  %93 = vmatpush.msra.mxu0 0.0
  %94 = vmatpush.msra.mxu0 0.0
  %95 = vmatpush.msra.mxu0 0.0
  %96 = vmatpush.msra.mxu0 0.0
  %97 = vmatpush.msra.mxu0 0.0
  %98 = vmatpush.msra.mxu0 0.0
  %99 = vmatpush.msra.mxu0 %v18
  %100 = vmatpush.msra.mxu0 %v17
  %101 = vmatpush.msra.mxu0 %v16
  %102 = vmatpush.msra.mxu0 %v15
  %103 = vmatmul.f32.gmra.mxu0 %v40
  %v104 = vpop.f32.mrf.mxu0
  %v105 = vadd.f32 %v36, %v104
  %106 = vmatmul.f32.gmra.mxu0 %v43
  %v107 = vpop.f32.mrf.mxu0
  %v108 = vadd.f32 %v36, %v107
  %109 = vmatmul.f32.gmra.mxu0 %v46
  %v110 = vpop.f32.mrf.mxu0
  %v111 = vadd.f32 %v36, %v110
  %112 = vmatmul.f32.gmra.mxu0 %v49
  %v113 = vpop.f32.mrf.mxu0
  %v114 = vadd.f32 %v36, %v113
  %115 = vmatmul.f32.gmra.mxu0 %v52
  %v116 = vpop.f32.mrf.mxu0
  %v117 = vadd.f32 %v36, %v116
  %118 = vmatmul.f32.gmra.mxu0 %v55
  %v119 = vpop.f32.mrf.mxu0
  %v120 = vadd.f32 %v36, %v119
  %121 = vmatmul.f32.gmra.mxu0 %v58
  %v122 = vpop.f32.mrf.mxu0
  %v123 = vadd.f32 %v36, %v122
  %124 = vmatmul.f32.gmra.mxu0 %v61
  %v125 = vpop.f32.mrf.mxu0
  %v126 = vadd.f32 %v36, %v125
  %127 = vmatmul.f32.gmra.mxu0 %v64
  %v128 = vpop.f32.mrf.mxu0
  %v129 = vadd.f32 %v36, %v128
  %130 = vmatmul.f32.gmra.mxu0 %v67
  %v131 = vpop.f32.mrf.mxu0
  %v132 = vadd.f32 %v36, %v131
  %133 = vmatmul.f32.gmra.mxu0 %v70
  %v134 = vpop.f32.mrf.mxu0
  %v135 = vadd.f32 %v36, %v134
  %136 = vmatmul.f32.gmra.mxu0 %v73
  %v137 = vpop.f32.mrf.mxu0
  %v138 = vadd.f32 %v36, %v137
  %139 = vmatmul.f32.gmra.mxu0 %v76
  %v140 = vpop.f32.mrf.mxu0
  %v141 = vadd.f32 %v36, %v140
  %142 = vmatmul.f32.gmra.mxu0 %v79
  %v143 = vpop.f32.mrf.mxu0
  %v144 = vadd.f32 %v36, %v143
  %145 = vmatmul.f32.gmra.mxu0 %v82
  %v146 = vpop.f32.mrf.mxu0
  %v147 = vadd.f32 %v36, %v146
  %148 = vmatmul.f32.gmra.mxu0 %v85
  %v149 = vpop.f32.mrf.mxu0
  %v150 = vadd.f32 %v36, %v149
  %151 = vdwg.mxu0
  %152 = vxpose.xlu0.b32.start [1/16] %v105, 128
  %153 = vxpose.xlu0.b32.cont [2/16] %v108, 128
  %154 = vxpose.xlu0.b32.cont [3/16] %v111, 128
  %155 = vxpose.xlu0.b32.cont [4/16] %v114, 128
  %156 = vxpose.xlu0.b32.cont [5/16] %v117, 128
  %157 = vxpose.xlu0.b32.cont [6/16] %v120, 128
  %158 = vxpose.xlu0.b32.cont [7/16] %v123, 128
  %159 = vxpose.xlu0.b32.cont [8/16] %v126, 128
  %160 = vxpose.xlu0.b32.cont [9/16] %v129, 128
  %161 = vxpose.xlu0.b32.cont [10/16] %v132, 128
  %162 = vxpose.xlu0.b32.cont [11/16] %v135, 128
  %163 = vxpose.xlu0.b32.cont [12/16] %v138, 128
  %164 = vxpose.xlu0.b32.cont [13/16] %v141, 128
  %165 = vxpose.xlu0.b32.cont [14/16] %v144, 128
  %166 = vxpose.xlu0.b32.cont [15/16] %v147, 128
  %167 = vxpose.xlu0.b32.end [16/16] %v150, 128
  %v168 = vpop.trf.xlu0
  %v169 = vpop.trf.xlu0
  %v170 = vpop.trf.xlu0
  %v171 = vpop.trf.xlu0
  %v172 = vpop.trf.xlu0
  %v173 = vpop.trf.xlu0
  %v174 = vpop.trf.xlu0
  %v175 = vpop.trf.xlu0
  %v176 = vpop.trf.xlu0
  %v177 = vpop.trf.xlu0
  %v178 = vpop.trf.xlu0
  %v179 = vpop.trf.xlu0
  %v180 = vpop.trf.xlu0
  %v181 = vpop.trf.xlu0
  %v182 = vpop.trf.xlu0
  %v183 = vpop.trf.xlu0
  %184 = vst [vmem:[%s3] sm:$0x3] %v168
  // Predicated region
  $region14: #{qa_outputs_forward.1} parent=0 // pred_check
    _
  $region15: #{qa_outputs_forward.1} parent=0 // pred_check_branch
    %186 = sbr.rel (0) target = $region17
  $region16: #{qa_outputs_forward.1} parent=0 // pred_region
    _
  $region17: #{qa_outputs_forward.1} parent=0 // pred_fallthru
    _
  // Predicated region
  $region18: #{qa_outputs_forward.1} parent=0 // pred_check
    _
  $region19: #{qa_outputs_forward.1} parent=0 // pred_check_branch
    %188 = sbr.rel (0) target = $region21
  $region20: #{qa_outputs_forward.1} parent=0 // pred_region
    _
  $region21: #{qa_outputs_forward.1} parent=0 // pred_fallthru
    _

</llo_original>
